<compile_context>
chip_gen: v7x
topology: tpu7x:2x2x1
jax: 0.10.0
libtpu: 0.0.40
codegen_flags: <defaults>
</compile_context>

<pallas_src>
import jax
import jax.numpy as jnp
from jax.experimental import pallas as pl
from jax.experimental.pallas import tpu as pltpu


def _round_up(x: int, m: int) -> int:
    return ((x + m - 1) // m) * m


# ---------------------------------------------------------------------------
# Kernels
# ---------------------------------------------------------------------------
def _elementwise_loss(inp, tgt, d):
    """Loss given d = target @ sim (without the +1); all f32.

    With L = softplus(x) = log(1 + exp(x)) and S = d + 1:
      -( S*t*(x - L) + (1 - t)*(-L) ) = L*(1 + t*(S-1)) - S*t*x
                                      = L + t*(d*(L - x) - x)
    """
    sp = jnp.maximum(inp, 0.0) + jnp.log1p(jnp.exp(-jnp.abs(inp)))  # stable softplus
    return sp + tgt * (d * (sp - inp) - inp)


def _resident_kernel(inp_ref, tgt_ref, sim_ref, out_ref):
    inp = inp_ref[...]                               # (TB, Npad) f32
    tgt = tgt_ref[...].astype(jnp.float32)           # (TB, Npad) bf16 -> f32 (exact for 0/1)
    d = jnp.dot(tgt, sim_ref[...], preferred_element_type=jnp.float32)
    out_ref[...] = _elementwise_loss(inp, tgt, d).astype(out_ref.dtype)


def _ktiled_kernel(inp_ref, tgt_e_ref, tgt_k_ref, sim_ref, out_ref, acc_ref):
    k = pl.program_id(2)

    @pl.when(k == 0)
    def _init():
        acc_ref[...] = jnp.zeros_like(acc_ref)

    acc_ref[...] += jnp.dot(tgt_k_ref[...].astype(jnp.float32), sim_ref[...],
                            preferred_element_type=jnp.float32)

    @pl.when(k == pl.num_programs(2) - 1)
    def _epilogue():
        inp = inp_ref[...]
        tgt = tgt_e_ref[...].astype(jnp.float32)
        out_ref[...] = _elementwise_loss(inp, tgt, acc_ref[...]).astype(out_ref.dtype)


# ---------------------------------------------------------------------------
# Tiling plan
# ---------------------------------------------------------------------------
def _vmem_plan():
    try:
        cap = int(pltpu.get_tpu_info().vmem_capacity_bytes)
    except Exception:
        cap = 64 * 1024 * 1024                       # v7x-safe fallback (smallest VMEM/TC)
    vmem_limit = int(cap * 0.85)                     # ~54 MiB v7x, ~109 MiB v5e/v6e
    budget = int(vmem_limit * 0.85)                  # headroom for compiler scratch
    return vmem_limit, budget


def _choose_plan(b, npad, plan):
    vmem_limit, budget = _vmem_plan()
    b16 = _round_up(max(b, 1), 16)
    # Streamed bytes per batch row, double-buffered: inp f32 + target bf16 + out f32.
    row_bytes = 2 * (4 + 2 + 4) * npad

    if plan in ("auto", "resident"):
        # Budget sim at 2x even though we request single-buffering, so the plan
        # never depends on pl.Buffered(1) being honored by this JAX version.
        sim_bytes = 2 * npad * npad * 4
        rows_fit = (budget - sim_bytes) // row_bytes
        need = max(16, min(256, b16))
        if plan == "resident" or rows_fit >= need:
            tb = max(16, (min(rows_fit, b16) // 16) * 16)
            return dict(kind="resident", tb=tb, vmem_limit=vmem_limit)

    # K-tiled fallback: bounded VMEM for arbitrarily large N.
    for cand in (1024, 512, 256, 128):
        if npad % cand:                              # keep K tiles exactly covering npad
            continue
        tk = tn = cand
        fixed = 2 * tk * tn * 4                      # sim tile, double-buffered
        per_row = 24 * tn + 4 * tk                   # inp/tgt/out (2x) + acc + tgt_k (2x)
        rows = (budget - fixed) // per_row
        if rows >= max(16, min(64, b16)) or cand == 128:
            tb = max(16, (min(rows, b16) // 16) * 16)
            return dict(kind="ktiled", tb=tb, tk=tk, tn=tn, vmem_limit=vmem_limit)
    raise AssertionError("no K-tiling configuration found")


def _block_spec(shape, index_map, *, buffers=None):
    """BlockSpec, optionally requesting an explicit buffer count (guarded)."""
    if buffers is not None:
        try:
            return pl.BlockSpec(shape, index_map,
                                pipeline_mode=pl.Buffered(buffer_count=buffers))
        except Exception:                            # pipeline_mode / Buffered unavailable
            pass
    return pl.BlockSpec(shape, index_map)


# ---------------------------------------------------------------------------
# Public wrapper
# ---------------------------------------------------------------------------
def similarity_loss1(inp, target, sim, *, plan="auto"):
    """Elementwise SimilarityLoss1.

    inp, target: (B, N); sim: (N, N).  Returns (B, N) float32.
    plan: "auto" (default) or force "resident" / "ktiled" (mainly for tests).

    `target` is streamed as bfloat16 (exact for 0/1 labels, ~3 significant
    digits otherwise) to cut HBM traffic of the memory-bound kernel.
    """
    assert plan in ("auto", "resident", "ktiled")
    B, N = inp.shape
    assert target.shape == (B, N) and sim.shape == (N, N)

    inp = inp.astype(jnp.float32)
    sim = sim.astype(jnp.float32)
    tgt = target.astype(jnp.bfloat16)

    # Lane-dense class dimension: pad to a multiple of 128 only when needed.
    npad = _round_up(N, 128)
    if npad != N:
        inp = jnp.pad(inp, ((0, 0), (0, npad - N)))
        tgt = jnp.pad(tgt, ((0, 0), (0, npad - N)))
        sim = jnp.pad(sim, ((0, npad - N), (0, npad - N)))

    cfg = _choose_plan(B, npad, plan)
    vmem_limit = cfg["vmem_limit"]
    cost = pl.CostEstimate(
        flops=2 * B * npad * npad,
        transcendentals=2 * B * npad,
        bytes_accessed=(4 + 2 + 4) * B * npad + 4 * npad * npad,
    )

    if cfg["kind"] == "resident":
        tb = cfg["tb"]

        def call(sim_buffers):
            return pl.pallas_call(
                _resident_kernel,
                out_shape=jax.ShapeDtypeStruct((B, npad), jnp.float32),
                grid=(pl.cdiv(B, tb),),                       # ragged last block is masked
                in_specs=[
                    pl.BlockSpec((tb, npad), lambda i: (i, 0)),       # input rows (f32)
                    pl.BlockSpec((tb, npad), lambda i: (i, 0)),       # target rows (bf16)
                    _block_spec((npad, npad), lambda i: (0, 0),       # sim, VMEM-resident
                                buffers=sim_buffers),
                ],
                out_specs=pl.BlockSpec((tb, npad), lambda i: (i, 0)),
                compiler_params=pltpu.CompilerParams(
                    dimension_semantics=("parallel",),                # megacore on v7x
                    vmem_limit_bytes=vmem_limit,
                ),
                cost_estimate=cost,
            )(inp, tgt, sim)

        try:
            out = call(1)          # single-buffer the never-changing sim block
        except Exception:
            out = call(None)       # pipeliner rejected Buffered(1): default buffering
    else:
        tb, tk, tn = cfg["tb"], cfg["tk"], cfg["tn"]
        out = pl.pallas_call(
            _ktiled_kernel,
            out_shape=jax.ShapeDtypeStruct((B, npad), jnp.float32),
            grid=(pl.cdiv(B, tb), npad // tn, npad // tk),    # reduction axis last
            in_specs=[
                pl.BlockSpec((tb, tn), lambda i, j, k: (i, j)),       # input (epilogue)
                pl.BlockSpec((tb, tn), lambda i, j, k: (i, j)),       # target (epilogue)
                pl.BlockSpec((tb, tk), lambda i, j, k: (i, k)),       # target (dot lhs)
                pl.BlockSpec((tk, tn), lambda i, j, k: (k, j)),       # sim tile
            ],
            out_specs=pl.BlockSpec((tb, tn), lambda i, j, k: (i, j)),
            scratch_shapes=[pltpu.VMEM((tb, tn), jnp.float32)],       # d accumulator
            compiler_params=pltpu.CompilerParams(
                dimension_semantics=("parallel", "parallel", "arbitrary"),
                vmem_limit_bytes=vmem_limit,
            ),
            cost_estimate=cost,
        )(inp, tgt, tgt, sim)

    return out if npad == N else out[:, :N]


# ---------------------------------------------------------------------------
# Reference + self-test
# ---------------------------------------------------------------------------
def similarity_loss1_ref(inp, target, sim):
    """Pure-JAX mirror of the PyTorch module."""
    smatrix = jnp.matmul(target, sim, precision=jax.lax.Precision.HIGHEST) + 1.0
    p = jnp.exp(inp)
    return -(smatrix * target * (inp - jnp.log(p + 1.0))
             + (1.0 - target) * -jnp.log(1.0 + p))


def _make_inputs(key, b, n):
    k_inp, k_tgt, k_sim = jax.random.split(key, 3)
    inp = jax.random.normal(k_inp, (b, n), dtype=jnp.float32)
    target = (jax.random.uniform(k_tgt, (b, n)) < 0.3).astype(jnp.float32)
    raw = jax.random.uniform(k_sim, (n, n), dtype=jnp.float32)
    sim = 0.5 * (raw + raw.T)
    sim = sim.at[jnp.arange(n), jnp.arange(n)].set(1.0)
    return inp, target, sim


def _check(name, out, ref, atol=1e-4, rtol=1e-4):
    assert out.shape == ref.shape, f"{name}: shape {out.shape} vs {ref.shape}"
    assert jnp.allclose(out, ref, atol=atol, rtol=rtol), f"{name}: mismatch vs reference"


if __name__ == "__main__":
    key = jax.random.PRNGKey(0)
    k0, k1, k2 = jax.random.split(key, 3)

    # Case 1: small aligned batch, unaligned class dim (lane-padding path).
    inp1, tgt1, sim1 = _make_inputs(k0, 16, 32)
    out1 = jax.block_until_ready(similarity_loss1(inp1, tgt1, sim1))
    _check("case1", out1, similarity_loss1_ref(inp1, tgt1, sim1))

    # Case 2: ragged batch (no batch padding) + class padding, resident-sim path.
    inp2, tgt2, sim2 = _make_inputs(k1, 300, 200)
    out2 = jax.block_until_ready(similarity_loss1(inp2, tgt2, sim2))
    _check("case2", out2, similarity_loss1_ref(inp2, tgt2, sim2))

    # Case 3: force the K-tiled (large-N fallback) path at a small shape.
    inp3, tgt3, sim3 = _make_inputs(k2, 120, 384)
    out3 = jax.block_until_ready(similarity_loss1(inp3, tgt3, sim3, plan="ktiled"))
    _check("case3", out3, similarity_loss1_ref(inp3, tgt3, sim3))

    print("KERNEL_OK")
</pallas_src>

<mosaic_0001>
module attributes {stable_mosaic.version = 11 : i64} {
  func.func @_resident_kernel(%arg0: i32, %arg1: memref<16x128xf32, #tpu.memory_space<vmem>>, %arg2: memref<16x128xbf16, #tpu.memory_space<vmem>>, %arg3: memref<128x128xf32, #tpu.memory_space<vmem>>, %arg4: memref<16x128xf32, #tpu.memory_space<vmem>>) attributes {dimension_semantics = [#tpu.dimension_semantics<parallel>], iteration_bounds = array<i64: 1>, scalar_prefetch = 0 : i64, scratch_operands = 0 : i64, tpu.core_type = #tpu.core_type<tc>, window_params = [{transform_indices = @transform_0, window_bounds = array<i64: 16, 128>}, {transform_indices = @transform_1, window_bounds = array<i64: 16, 128>}, {pipeline_mode = #tpu.pipeline_mode<synchronous>, transform_indices = @transform_2, window_bounds = array<i64: 128, 128>}, {transform_indices = @transform_3, window_bounds = array<i64: 16, 128>}]} {
    %c0 = arith.constant 0 : index
    %c0_0 = arith.constant 0 : index
    %0 = vector.load %arg1[%c0, %c0_0] : memref<16x128xf32, #tpu.memory_space<vmem>>, vector<16x128xf32>
    %c0_1 = arith.constant 0 : index
    %c0_2 = arith.constant 0 : index
    %1 = vector.load %arg2[%c0_1, %c0_2] : memref<16x128xbf16, #tpu.memory_space<vmem>>, vector<16x128xbf16>
    %2 = arith.extf %1 : vector<16x128xbf16> to vector<16x128xf32>
    %c0_3 = arith.constant 0 : index
    %c0_4 = arith.constant 0 : index
    %3 = vector.load %arg3[%c0_3, %c0_4] : memref<128x128xf32, #tpu.memory_space<vmem>>, vector<128x128xf32>
    %cst = arith.constant dense<0.000000e+00> : vector<16x128xf32>
    %4 = tpu.matmul %2, %3, %cst {dimension_numbers = #tpu.dot_dimension_numbers<[1], [0], [0], [1], [0, 0, 1, 1], [], []>} : vector<16x128xf32>, vector<128x128xf32>, vector<16x128xf32> -> vector<16x128xf32>
    %cst_5 = arith.constant 0.000000e+00 : f32
    %5 = vector.broadcast %cst_5 : f32 to vector<16x128xf32>
    %6 = arith.maximumf %0, %5 : vector<16x128xf32>
    %7 = math.absf %0 : vector<16x128xf32>
    %cst_6 = arith.constant 0.000000e+00 : f32
    %8 = vector.broadcast %cst_6 : f32 to vector<16x128xf32>
    %9 = arith.subf %8, %7 : vector<16x128xf32>
    %10 = math.exp %9 : vector<16x128xf32>
    %11 = math.log1p %10 : vector<16x128xf32>
    %12 = arith.addf %6, %11 : vector<16x128xf32>
    %13 = arith.subf %12, %0 : vector<16x128xf32>
    %14 = arith.mulf %4, %13 : vector<16x128xf32>
    %15 = arith.subf %14, %0 : vector<16x128xf32>
    %16 = arith.mulf %2, %15 : vector<16x128xf32>
    %17 = arith.addf %12, %16 : vector<16x128xf32>
    %c0_7 = arith.constant 0 : index
    %c0_8 = arith.constant 0 : index
    %18 = vector.load %arg4[%c0_7, %c0_8] : memref<16x128xf32, #tpu.memory_space<vmem>>, vector<16x128xf32>
    tpu.vector_store %arg4[%c0_7, %c0_8], %17 {strides = array<i32>} : memref<16x128xf32, #tpu.memory_space<vmem>>, vector<16x128xf32>,
    return
  }
  func.func @transform_0(%arg0: i32) -> (i32, i32) {
    %c0_i32 = arith.constant 0 : i32
    %c0_i32_0 = arith.constant 0 : i32
    return %arg0, %c0_i32 : i32, i32
  }
  func.func @transform_1(%arg0: i32) -> (i32, i32) {
    %c0_i32 = arith.constant 0 : i32
    %c0_i32_0 = arith.constant 0 : i32
    return %arg0, %c0_i32 : i32, i32
  }
  func.func @transform_2(%arg0: i32) -> (i32, i32) {
    %c0_i32 = arith.constant 0 : i32
    %c0_i32_0 = arith.constant 0 : i32
    %c0_i32_1 = arith.constant 0 : i32
    return %c0_i32, %c0_i32_0 : i32, i32
  }
  func.func @transform_3(%arg0: i32) -> (i32, i32) {
    %c0_i32 = arith.constant 0 : i32
    %c0_i32_0 = arith.constant 0 : i32
    return %arg0, %c0_i32 : i32, i32
  }
}

module attributes {stable_mosaic.version = 11 : i64} {
  func.func @_resident_kernel(%arg0: i32, %arg1: memref<16x128xf32, #tpu.memory_space<vmem>>, %arg2: memref<16x128xbf16, #tpu.memory_space<vmem>>, %arg3: memref<128x128xf32, #tpu.memory_space<vmem>>, %arg4: memref<16x128xf32, #tpu.memory_space<vmem>>) attributes {dimension_semantics = [#tpu.dimension_semantics<parallel>], iteration_bounds = array<i64: 1>, scalar_prefetch = 0 : i64, scratch_operands = 0 : i64, tpu.core_type = #tpu.core_type<tc>, window_params = [{transform_indices = @transform_0, window_bounds = array<i64: 16, 128>}, {transform_indices = @transform_1, window_bounds = array<i64: 16, 128>}, {pipeline_mode = #tpu.pipeline_mode<synchronous>, transform_indices = @transform_2, window_bounds = array<i64: 128, 128>}, {transform_indices = @transform_3, window_bounds = array<i64: 16, 128>}]} {
    %c0 = arith.constant 0 : index
    %c0_0 = arith.constant 0 : index
    %0 = vector.load %arg1[%c0, %c0_0] : memref<16x128xf32, #tpu.memory_space<vmem>>, vector<16x128xf32>
    %c0_1 = arith.constant 0 : index
    %c0_2 = arith.constant 0 : index
    %1 = vector.load %arg2[%c0_1, %c0_2] : memref<16x128xbf16, #tpu.memory_space<vmem>>, vector<16x128xbf16>
    %2 = arith.extf %1 : vector<16x128xbf16> to vector<16x128xf32>
    %c0_3 = arith.constant 0 : index
    %c0_4 = arith.constant 0 : index
    %3 = vector.load %arg3[%c0_3, %c0_4] : memref<128x128xf32, #tpu.memory_space<vmem>>, vector<128x128xf32>
    %cst = arith.constant dense<0.000000e+00> : vector<16x128xf32>
    %4 = tpu.matmul %2, %3, %cst {dimension_numbers = #tpu.dot_dimension_numbers<[1], [0], [0], [1], [0, 0, 1, 1], [], []>} : vector<16x128xf32>, vector<128x128xf32>, vector<16x128xf32> -> vector<16x128xf32>
    %cst_5 = arith.constant 0.000000e+00 : f32
    %5 = vector.broadcast %cst_5 : f32 to vector<16x128xf32>
    %6 = arith.maximumf %0, %5 : vector<16x128xf32>
    %7 = math.absf %0 : vector<16x128xf32>
    %cst_6 = arith.constant 0.000000e+00 : f32
    %8 = vector.broadcast %cst_6 : f32 to vector<16x128xf32>
    %9 = arith.subf %8, %7 : vector<16x128xf32>
    %10 = math.exp %9 : vector<16x128xf32>
    %11 = math.log1p %10 : vector<16x128xf32>
    %12 = arith.addf %6, %11 : vector<16x128xf32>
    %13 = arith.subf %12, %0 : vector<16x128xf32>
    %14 = arith.mulf %4, %13 : vector<16x128xf32>
    %15 = arith.subf %14, %0 : vector<16x128xf32>
    %16 = arith.mulf %2, %15 : vector<16x128xf32>
    %17 = arith.addf %12, %16 : vector<16x128xf32>
    %c0_7 = arith.constant 0 : index
    %c0_8 = arith.constant 0 : index
    %18 = vector.load %arg4[%c0_7, %c0_8] : memref<16x128xf32, #tpu.memory_space<vmem>>, vector<16x128xf32>
    tpu.vector_store %arg4[%c0_7, %c0_8], %17 {strides = array<i32>} : memref<16x128xf32, #tpu.memory_space<vmem>>, vector<16x128xf32>,
    return
  }
  func.func @transform_0(%arg0: i32) -> (i32, i32) {
    %c0_i32 = arith.constant 0 : i32
    %c0_i32_0 = arith.constant 0 : i32
    return %arg0, %c0_i32 : i32, i32
  }
  func.func @transform_1(%arg0: i32) -> (i32, i32) {
    %c0_i32 = arith.constant 0 : i32
    %c0_i32_0 = arith.constant 0 : i32
    return %arg0, %c0_i32 : i32, i32
  }
  func.func @transform_2(%arg0: i32) -> (i32, i32) {
    %c0_i32 = arith.constant 0 : i32
    %c0_i32_0 = arith.constant 0 : i32
    %c0_i32_1 = arith.constant 0 : i32
    return %c0_i32, %c0_i32_0 : i32, i32
  }
  func.func @transform_3(%arg0: i32) -> (i32, i32) {
    %c0_i32 = arith.constant 0 : i32
    %c0_i32_0 = arith.constant 0 : i32
    return %arg0, %c0_i32 : i32, i32
  }
}

</mosaic_0001>

<llo_original>
// kernel: tpu_custom_call.1
$region0: #{tpu_custom_call.1}
  #allocation0 [shape = 'u32[]', space=smem, size = 0x4, offset = 0x4, fixed_abs, tag = 'smem constant byte address 0x4 - core index']
  #allocation1 [shape = 'u32[144,128]{1,0:T(1,128)}', space=vmem, size = 0x12000, scoped, tag = 'internal scratch']
  %s0 = inlined_call_operand.hbm [shape: f32[16,128], index: 0, kind: input, shape index: {}]
  %s1 = inlined_call_operand.hbm [shape: bf16[16,128], index: 1, kind: input, shape index: {}]
  %s2 = inlined_call_operand.hbm [shape: f32[128,128], index: 2, kind: input, shape index: {}]
  %s3 = inlined_call_operand.hbm [shape: f32[16,128], index: 3, kind: output, shape index: {}]
  %s4 = sld [smem:[#allocation0]]
  $region34: #{tpu_custom_call.1} parent=0
    _
  %s6 = ssub.s32 1, %s4
  %s7 = scalar_select 0, %s6, %s4
  $region1: #{tpu_custom_call.1} parent=0
    #allocation2 [shape = 'u8[8192]{0}', space=vmem, size = 0x2000, scoped, tag = 'input window, operand 0, single buffered']
    #allocation3 [shape = 's32[1]{0}', space=sflag, size = 0x4, scoped, tag = 'scoped memory for tpu_custom_call.1']
    #allocation4 [shape = 's32[1]{0}', space=sflag, size = 0x4, scoped, tag = 'scoped memory for tpu_custom_call.1']
    #allocation5 [shape = 'u8[4096]{0}', space=vmem, size = 0x1000, scoped, tag = 'input window, operand 1, single buffered']
    #allocation6 [shape = 's32[1]{0}', space=sflag, size = 0x4, scoped, tag = 'scoped memory for tpu_custom_call.1']
    #allocation7 [shape = 'u8[65536]{0}', space=vmem, size = 0x10000, scoped, tag = 'input window, operand 2, single buffered']
    #allocation8 [shape = 'u8[8192]{0}', space=vmem, size = 0x2000, scoped, tag = 'output window, operand 0, single buffered']
    %8 = vsyncpa [#allocation3], 0
    %9 = vsyncpa [#allocation6], 0
    %10 = vsyncpa [#allocation4], 0
    // Predicated region
    $region2: #{tpu_custom_call.1} parent=1 // pred_check
      _
    $region3: #{tpu_custom_call.1} parent=1 // pred_check_branch
      %12 = sbr.rel (0) target = $region5
    $region4: #{tpu_custom_call.1} parent=1 // pred_region
      %s14 = ssub.s32 256, 256
      %15 = vsyncadd [#allocation3], %s14
      %s16 = sshll.u32 [#allocation2], 4
      %s17 = int_to_ptr.vmem [resolvable:$true] %s16
      %22 = dma.hbm_to_vmem [thread:$0]  %s0, 256, %s17, [#allocation3], 128, 128, 8
    $region5: #{tpu_custom_call.1} parent=1 // pred_fallthru
      _
    // Predicated region
    $region6: #{tpu_custom_call.1} parent=1 // pred_check
      _
    $region7: #{tpu_custom_call.1} parent=1 // pred_check_branch
      %24 = sbr.rel (0) target = $region9
    $region8: #{tpu_custom_call.1} parent=1 // pred_region
      %s26 = ssub.s32 128, 128
      %27 = vsyncadd [#allocation6], %s26
      %s28 = sshll.u32 [#allocation5], 4
      %s29 = int_to_ptr.vmem [resolvable:$true] %s28
      %34 = dma.hbm_to_vmem [thread:$0]  %s1, 128, %s29, [#allocation6], 64, 64, 4
    $region9: #{tpu_custom_call.1} parent=1 // pred_fallthru
      _
    // Predicated region
    $region10: #{tpu_custom_call.1} parent=1 // pred_check
      _
    $region11: #{tpu_custom_call.1} parent=1 // pred_check_branch
      %36 = sbr.rel (0) target = $region13
    $region12: #{tpu_custom_call.1} parent=1 // pred_region
      %s38 = ssub.s32 2048, 2048
      %39 = vsyncadd [#allocation6], %s38
      %s40 = sshll.u32 [#allocation7], 4
      %s41 = int_to_ptr.vmem [resolvable:$true] %s40
      %46 = dma.hbm_to_vmem [thread:$0]  %s2, 2048, %s41, [#allocation6], 128, 128, 8
    $region13: #{tpu_custom_call.1} parent=1 // pred_fallthru
      _
    // Predicated region
    $region14: #{tpu_custom_call.1} parent=1 // pred_check
      _
    $region15: #{tpu_custom_call.1} parent=1 // pred_check_branch
      %48 = sbr.rel (0) target = $region17
    $region16: #{tpu_custom_call.1} parent=1 // pred_region
      %49 = dma.done [#allocation3], 256
    $region17: #{tpu_custom_call.1} parent=1 // pred_fallthru
      _
    // Predicated region
    $region18: #{tpu_custom_call.1} parent=1 // pred_check
      _
    $region19: #{tpu_custom_call.1} parent=1 // pred_check_branch
      %51 = sbr.rel (0) target = $region21
    $region20: #{tpu_custom_call.1} parent=1 // pred_region
      %52 = dma.done [#allocation6], 128
    $region21: #{tpu_custom_call.1} parent=1 // pred_fallthru
      _
    // Predicated region
    $region22: #{tpu_custom_call.1} parent=1 // pred_check
      _
    $region23: #{tpu_custom_call.1} parent=1 // pred_check_branch
      %54 = sbr.rel (0) target = $region25
    $region24: #{tpu_custom_call.1} parent=1 // pred_region
      %55 = dma.done [#allocation6], 2048
    $region25: #{tpu_custom_call.1} parent=1 // pred_fallthru
      _
    %v56 = vld [vmem:[#allocation2] sm:$0xff]
    %v57 = vld [vmem:[#allocation2 + $0x8] sm:$0xff]
    %v58 = vld [vmem:[#allocation5] sm:$0xf]
    %v59 = vld [vmem:[#allocation5 + $0x4] sm:$0xf]
    %v60 = vunpack.c.l.bf16 %v58
    %v61 = vunpack.c.l.bf16 %v59
    %v62 = vld [vmem:[#allocation7] sm:$0xff]
    %v63 = vld [vmem:[#allocation7 + $0x8] sm:$0xff]
    %v64 = vld [vmem:[#allocation7 + $0x10] sm:$0xff]
    %v65 = vld [vmem:[#allocation7 + $0x18] sm:$0xff]
    %v66 = vld [vmem:[#allocation7 + $0x20] sm:$0xff]
    %v67 = vld [vmem:[#allocation7 + $0x28] sm:$0xff]
    %v68 = vld [vmem:[#allocation7 + $0x30] sm:$0xff]
    %v69 = vld [vmem:[#allocation7 + $0x38] sm:$0xff]
    %v70 = vld [vmem:[#allocation7 + $0x40] sm:$0xff]
    %v71 = vld [vmem:[#allocation7 + $0x48] sm:$0xff]
    %v72 = vld [vmem:[#allocation7 + $0x50] sm:$0xff]
    %v73 = vld [vmem:[#allocation7 + $0x58] sm:$0xff]
    %v74 = vld [vmem:[#allocation7 + $0x60] sm:$0xff]
    %v75 = vld [vmem:[#allocation7 + $0x68] sm:$0xff]
    %v76 = vld [vmem:[#allocation7 + $0x70] sm:$0xff]
    %v77 = vld [vmem:[#allocation7 + $0x78] sm:$0xff]
    %78 = vmatprep.subr.mxu0 0.0
    %79 = vmatpush1.msra.mxu0 %v62
    %80 = vmatprep.subr.mxu0 0.0
    %81 = vmatpush1.msra.mxu0 %v63
    %82 = vmatprep.subr.mxu0 0.0
    %83 = vmatpush1.msra.mxu0 %v64
    %84 = vmatprep.subr.mxu0 0.0
    %85 = vmatpush1.msra.mxu0 %v65
    %86 = vmatprep.subr.mxu0 0.0
    %87 = vmatpush1.msra.mxu0 %v66
    %88 = vmatprep.subr.mxu0 0.0
    %89 = vmatpush1.msra.mxu0 %v67
    %90 = vmatprep.subr.mxu0 0.0
    %91 = vmatpush1.msra.mxu0 %v68
    %92 = vmatprep.subr.mxu0 0.0
    %93 = vmatpush1.msra.mxu0 %v69
    %94 = vmatprep.subr.mxu0 0.0
    %95 = vmatpush1.msra.mxu0 %v70
    %96 = vmatprep.subr.mxu0 0.0
    %97 = vmatpush1.msra.mxu0 %v71
    %98 = vmatprep.subr.mxu0 0.0
    %99 = vmatpush1.msra.mxu0 %v72
    %100 = vmatprep.subr.mxu0 0.0
    %101 = vmatpush1.msra.mxu0 %v73
    %102 = vmatprep.subr.mxu0 0.0
    %103 = vmatpush1.msra.mxu0 %v74
    %104 = vmatprep.subr.mxu0 0.0
    %105 = vmatpush1.msra.mxu0 %v75
    %106 = vmatprep.subr.mxu0 0.0
    %107 = vmatpush1.msra.mxu0 %v76
    %108 = vmatprep.subr.mxu0 0.0
    %109 = vmatpush1.msra.mxu0 %v77
    %110 = vmatprep.subr.mxu0 0.0
    %111 = vmatpush1.msra.mxu0 0.0
    %112 = vmatprep.subr.mxu0 0.0
    %113 = vmatpush1.msra.mxu0 0.0
    %114 = vmatprep.subr.mxu0 0.0
    %115 = vmatpush1.msra.mxu0 0.0
    %116 = vmatprep.subr.mxu0 0.0
    %117 = vmatpush1.msra.mxu0 0.0
    %118 = vmatprep.subr.mxu0 0.0
    %119 = vmatpush1.msra.mxu0 0.0
    %120 = vmatprep.subr.mxu0 0.0
    %121 = vmatpush1.msra.mxu0 0.0
    %122 = vmatprep.subr.mxu0 0.0
    %123 = vmatpush1.msra.mxu0 0.0
    %124 = vmatprep.subr.mxu0 0.0
    %125 = vmatpush1.msra.mxu0 0.0
    %126 = vmatprep.subr.mxu0 0.0
    %127 = vmatpush1.msra.mxu0 0.0
    %128 = vmatprep.subr.mxu0 0.0
    %129 = vmatpush1.msra.mxu0 0.0
    %130 = vmatprep.subr.mxu0 0.0
    %131 = vmatpush1.msra.mxu0 0.0
    %132 = vmatprep.subr.mxu0 0.0
    %133 = vmatpush1.msra.mxu0 0.0
    %134 = vmatprep.subr.mxu0 0.0
    %135 = vmatpush1.msra.mxu0 0.0
    %136 = vmatprep.subr.mxu0 0.0
    %137 = vmatpush1.msra.mxu0 0.0
    %138 = vmatprep.subr.mxu0 0.0
    %139 = vmatpush1.msra.mxu0 0.0
    %140 = vmatprep.subr.mxu0 0.0
    %141 = vmatpush1.msra.mxu0 0.0
    %142 = vmatprep.mubr.f32.mxu0 0.0
    %143 = vmatmul.mubr.f32.gmra.mrb[0].mxu0 %v60
    %v144 = vpop.f32.mrb[0].mxu0
    %v145 = vadd.f32 0.0, %v144
    %v146 = vpop.f32.mrb[0].mxu0
    %147 = vmatprep.mubr.f32.mxu0 0.0
    %148 = vmatmul.mubr.f32.gmra.mrb[0].mxu0 %v61
    %v149 = vpop.f32.mrb[0].mxu0
    %v150 = vadd.f32 0.0, %v149
    %v151 = vpop.f32.mrb[0].mxu0
    %152 = vdwg.mxu0
    %v153 = vmax.f32 %v56, 0.0
    %v154 = vmax.f32 %v57, 0.0
    %v155 = vand.u32 2147483647, %v56
    %v156 = vand.u32 2147483647, %v57
    %v157 = vsub.f32 0.0, %v155
    %v158 = vsub.f32 0.0, %v156
    %v159 = vmul.f32 %v157, 1.442695
    %v160 = vpow.pop %v159
    %v161 = vmul.f32 %v158, 1.442695
    %v162 = vpow.pop %v161
    %v163 = vadd.f32 %v160, 1.0
    %v164 = vlog2.pop %v163
    %v165 = vmul.f32 %v164, 0.6931472
    %v166 = vmul.f32 -0.5, %v160
    %v167 = vadd.f32 %v166, 1.0
    %v168 = vmul.f32 %v167, %v160
    %v169 = vand.u32 2147483647, %v160
    %vm170 = vcmp.lt.f32.partialorder %v169, 0.0004427343
    %v171 = vsel %vm170, %v168, %v165
    %v172 = vadd.f32 %v162, 1.0
    %v173 = vlog2.pop %v172
    %v174 = vmul.f32 %v173, 0.6931472
    %v175 = vmul.f32 -0.5, %v162
    %v176 = vadd.f32 %v175, 1.0
    %v177 = vmul.f32 %v176, %v162
    %v178 = vand.u32 2147483647, %v162
    %vm179 = vcmp.lt.f32.partialorder %v178, 0.0004427343
    %v180 = vsel %vm179, %v177, %v174
    %v181 = vadd.f32 %v153, %v171
    %v182 = vadd.f32 %v154, %v180
    %v183 = vsub.f32 %v181, %v56
    %v184 = vsub.f32 %v182, %v57
    %v185 = vmul.f32 %v145, %v183
    %v186 = vmul.f32 %v150, %v184
    %v187 = vsub.f32 %v185, %v56
    %v188 = vsub.f32 %v186, %v57
    %v189 = vmul.f32 %v60, %v187
    %v190 = vmul.f32 %v61, %v188
    %v191 = vadd.f32 %v181, %v189
    %v192 = vadd.f32 %v182, %v190
    %193 = vst [vmem:[#allocation8] sm:$0xff] %v191
    %194 = vst [vmem:[#allocation8 + $0x8] sm:$0xff] %v192
    // Predicated region
    $region26: #{tpu_custom_call.1} parent=1 // pred_check
      _
    $region27: #{tpu_custom_call.1} parent=1 // pred_check_branch
      %196 = sbr.rel (0) target = $region29
    $region28: #{tpu_custom_call.1} parent=1 // pred_region
      %s198 = ssub.s32 256, 256
      %199 = vsyncadd [#allocation4], %s198
      %s200 = sshll.u32 [#allocation8], 4
      %s201 = int_to_ptr.vmem [resolvable:$true] %s200
      %206 = dma.vmem_to_hbm [thread:$0]  %s201, 256, %s3, [#allocation4], 128, 128, 8
    $region29: #{tpu_custom_call.1} parent=1 // pred_fallthru
      _
    // Predicated region
    $region30: #{tpu_custom_call.1} parent=1 // pred_check
      _
    $region31: #{tpu_custom_call.1} parent=1 // pred_check_branch
      %208 = sbr.rel (0) target = $region33
    $region32: #{tpu_custom_call.1} parent=1 // pred_region
      %209 = dma.done [#allocation4], 256
    $region33: #{tpu_custom_call.1} parent=1 // pred_fallthru
      _
    %210 = vsyncpa [#allocation3], 1
    %211 = vsyncpa [#allocation6], 1
    %212 = vsyncpa [#allocation4], 1

// kernel: tpu_custom_call.1
$region0: #{tpu_custom_call.1}
  #allocation0 [shape = 'u32[]', space=smem, size = 0x4, offset = 0x4, fixed_abs, tag = 'smem constant byte address 0x4 - core index']
  #allocation1 [shape = 'u32[144,128]{1,0:T(1,128)}', space=vmem, size = 0x12000, scoped, tag = 'internal scratch']
  %s0 = inlined_call_operand.hbm [shape: f32[16,128], index: 0, kind: input, shape index: {}]
  %s1 = inlined_call_operand.hbm [shape: bf16[16,128], index: 1, kind: input, shape index: {}]
  %s2 = inlined_call_operand.hbm [shape: f32[128,128], index: 2, kind: input, shape index: {}]
  %s3 = inlined_call_operand.hbm [shape: f32[16,128], index: 3, kind: output, shape index: {}]
  %s4 = sld [smem:[#allocation0]]
  $region34: #{tpu_custom_call.1} parent=0
    _
  %s6 = ssub.s32 1, %s4
  %s7 = scalar_select 0, %s6, %s4
  $region1: #{tpu_custom_call.1} parent=0
    #allocation2 [shape = 'u8[8192]{0}', space=vmem, size = 0x2000, scoped, tag = 'input window, operand 0, single buffered']
    #allocation3 [shape = 's32[1]{0}', space=sflag, size = 0x4, scoped, tag = 'scoped memory for tpu_custom_call.1']
    #allocation4 [shape = 's32[1]{0}', space=sflag, size = 0x4, scoped, tag = 'scoped memory for tpu_custom_call.1']
    #allocation5 [shape = 'u8[4096]{0}', space=vmem, size = 0x1000, scoped, tag = 'input window, operand 1, single buffered']
    #allocation6 [shape = 's32[1]{0}', space=sflag, size = 0x4, scoped, tag = 'scoped memory for tpu_custom_call.1']
    #allocation7 [shape = 'u8[65536]{0}', space=vmem, size = 0x10000, scoped, tag = 'input window, operand 2, single buffered']
    #allocation8 [shape = 'u8[8192]{0}', space=vmem, size = 0x2000, scoped, tag = 'output window, operand 0, single buffered']
    %8 = vsyncpa [#allocation3], 0
    %9 = vsyncpa [#allocation6], 0
    %10 = vsyncpa [#allocation4], 0
    // Predicated region
    $region2: #{tpu_custom_call.1} parent=1 // pred_check
      _
    $region3: #{tpu_custom_call.1} parent=1 // pred_check_branch
      %12 = sbr.rel (0) target = $region5
    $region4: #{tpu_custom_call.1} parent=1 // pred_region
      %s14 = ssub.s32 256, 256
      %15 = vsyncadd [#allocation3], %s14
      %s16 = sshll.u32 [#allocation2], 4
      %s17 = int_to_ptr.vmem [resolvable:$true] %s16
      %22 = dma.hbm_to_vmem [thread:$0]  %s0, 256, %s17, [#allocation3], 128, 128, 8
    $region5: #{tpu_custom_call.1} parent=1 // pred_fallthru
      _
    // Predicated region
    $region6: #{tpu_custom_call.1} parent=1 // pred_check
      _
    $region7: #{tpu_custom_call.1} parent=1 // pred_check_branch
      %24 = sbr.rel (0) target = $region9
    $region8: #{tpu_custom_call.1} parent=1 // pred_region
      %s26 = ssub.s32 128, 128
      %27 = vsyncadd [#allocation6], %s26
      %s28 = sshll.u32 [#allocation5], 4
      %s29 = int_to_ptr.vmem [resolvable:$true] %s28
      %34 = dma.hbm_to_vmem [thread:$0]  %s1, 128, %s29, [#allocation6], 64, 64, 4
    $region9: #{tpu_custom_call.1} parent=1 // pred_fallthru
      _
    // Predicated region
    $region10: #{tpu_custom_call.1} parent=1 // pred_check
      _
    $region11: #{tpu_custom_call.1} parent=1 // pred_check_branch
      %36 = sbr.rel (0) target = $region13
    $region12: #{tpu_custom_call.1} parent=1 // pred_region
      %s38 = ssub.s32 2048, 2048
      %39 = vsyncadd [#allocation6], %s38
      %s40 = sshll.u32 [#allocation7], 4
      %s41 = int_to_ptr.vmem [resolvable:$true] %s40
      %46 = dma.hbm_to_vmem [thread:$0]  %s2, 2048, %s41, [#allocation6], 128, 128, 8
    $region13: #{tpu_custom_call.1} parent=1 // pred_fallthru
      _
    // Predicated region
    $region14: #{tpu_custom_call.1} parent=1 // pred_check
      _
    $region15: #{tpu_custom_call.1} parent=1 // pred_check_branch
      %48 = sbr.rel (0) target = $region17
    $region16: #{tpu_custom_call.1} parent=1 // pred_region
      %49 = dma.done [#allocation3], 256
    $region17: #{tpu_custom_call.1} parent=1 // pred_fallthru
      _
    // Predicated region
    $region18: #{tpu_custom_call.1} parent=1 // pred_check
      _
    $region19: #{tpu_custom_call.1} parent=1 // pred_check_branch
      %51 = sbr.rel (0) target = $region21
    $region20: #{tpu_custom_call.1} parent=1 // pred_region
      %52 = dma.done [#allocation6], 128
    $region21: #{tpu_custom_call.1} parent=1 // pred_fallthru
      _
    // Predicated region
    $region22: #{tpu_custom_call.1} parent=1 // pred_check
      _
    $region23: #{tpu_custom_call.1} parent=1 // pred_check_branch
      %54 = sbr.rel (0) target = $region25
    $region24: #{tpu_custom_call.1} parent=1 // pred_region
      %55 = dma.done [#allocation6], 2048
    $region25: #{tpu_custom_call.1} parent=1 // pred_fallthru
      _
    %v56 = vld [vmem:[#allocation2] sm:$0xff]
    %v57 = vld [vmem:[#allocation2 + $0x8] sm:$0xff]
    %v58 = vld [vmem:[#allocation5] sm:$0xf]
    %v59 = vld [vmem:[#allocation5 + $0x4] sm:$0xf]
    %v60 = vunpack.c.l.bf16 %v58
    %v61 = vunpack.c.l.bf16 %v59
    %v62 = vld [vmem:[#allocation7] sm:$0xff]
    %v63 = vld [vmem:[#allocation7 + $0x8] sm:$0xff]
    %v64 = vld [vmem:[#allocation7 + $0x10] sm:$0xff]
    %v65 = vld [vmem:[#allocation7 + $0x18] sm:$0xff]
    %v66 = vld [vmem:[#allocation7 + $0x20] sm:$0xff]
    %v67 = vld [vmem:[#allocation7 + $0x28] sm:$0xff]
    %v68 = vld [vmem:[#allocation7 + $0x30] sm:$0xff]
    %v69 = vld [vmem:[#allocation7 + $0x38] sm:$0xff]
    %v70 = vld [vmem:[#allocation7 + $0x40] sm:$0xff]
    %v71 = vld [vmem:[#allocation7 + $0x48] sm:$0xff]
    %v72 = vld [vmem:[#allocation7 + $0x50] sm:$0xff]
    %v73 = vld [vmem:[#allocation7 + $0x58] sm:$0xff]
    %v74 = vld [vmem:[#allocation7 + $0x60] sm:$0xff]
    %v75 = vld [vmem:[#allocation7 + $0x68] sm:$0xff]
    %v76 = vld [vmem:[#allocation7 + $0x70] sm:$0xff]
    %v77 = vld [vmem:[#allocation7 + $0x78] sm:$0xff]
    %78 = vmatprep.subr.mxu0 0.0
    %79 = vmatpush1.msra.mxu0 %v62
    %80 = vmatprep.subr.mxu0 0.0
    %81 = vmatpush1.msra.mxu0 %v63
    %82 = vmatprep.subr.mxu0 0.0
    %83 = vmatpush1.msra.mxu0 %v64
    %84 = vmatprep.subr.mxu0 0.0
    %85 = vmatpush1.msra.mxu0 %v65
    %86 = vmatprep.subr.mxu0 0.0
    %87 = vmatpush1.msra.mxu0 %v66
    %88 = vmatprep.subr.mxu0 0.0
    %89 = vmatpush1.msra.mxu0 %v67
    %90 = vmatprep.subr.mxu0 0.0
    %91 = vmatpush1.msra.mxu0 %v68
    %92 = vmatprep.subr.mxu0 0.0
    %93 = vmatpush1.msra.mxu0 %v69
    %94 = vmatprep.subr.mxu0 0.0
    %95 = vmatpush1.msra.mxu0 %v70
    %96 = vmatprep.subr.mxu0 0.0
    %97 = vmatpush1.msra.mxu0 %v71
    %98 = vmatprep.subr.mxu0 0.0
    %99 = vmatpush1.msra.mxu0 %v72
    %100 = vmatprep.subr.mxu0 0.0
    %101 = vmatpush1.msra.mxu0 %v73
    %102 = vmatprep.subr.mxu0 0.0
    %103 = vmatpush1.msra.mxu0 %v74
    %104 = vmatprep.subr.mxu0 0.0
    %105 = vmatpush1.msra.mxu0 %v75
    %106 = vmatprep.subr.mxu0 0.0
    %107 = vmatpush1.msra.mxu0 %v76
    %108 = vmatprep.subr.mxu0 0.0
    %109 = vmatpush1.msra.mxu0 %v77
    %110 = vmatprep.subr.mxu0 0.0
    %111 = vmatpush1.msra.mxu0 0.0
    %112 = vmatprep.subr.mxu0 0.0
    %113 = vmatpush1.msra.mxu0 0.0
    %114 = vmatprep.subr.mxu0 0.0
    %115 = vmatpush1.msra.mxu0 0.0
    %116 = vmatprep.subr.mxu0 0.0
    %117 = vmatpush1.msra.mxu0 0.0
    %118 = vmatprep.subr.mxu0 0.0
    %119 = vmatpush1.msra.mxu0 0.0
    %120 = vmatprep.subr.mxu0 0.0
    %121 = vmatpush1.msra.mxu0 0.0
    %122 = vmatprep.subr.mxu0 0.0
    %123 = vmatpush1.msra.mxu0 0.0
    %124 = vmatprep.subr.mxu0 0.0
    %125 = vmatpush1.msra.mxu0 0.0
    %126 = vmatprep.subr.mxu0 0.0
    %127 = vmatpush1.msra.mxu0 0.0
    %128 = vmatprep.subr.mxu0 0.0
    %129 = vmatpush1.msra.mxu0 0.0
    %130 = vmatprep.subr.mxu0 0.0
    %131 = vmatpush1.msra.mxu0 0.0
    %132 = vmatprep.subr.mxu0 0.0
    %133 = vmatpush1.msra.mxu0 0.0
    %134 = vmatprep.subr.mxu0 0.0
    %135 = vmatpush1.msra.mxu0 0.0
    %136 = vmatprep.subr.mxu0 0.0
    %137 = vmatpush1.msra.mxu0 0.0
    %138 = vmatprep.subr.mxu0 0.0
    %139 = vmatpush1.msra.mxu0 0.0
    %140 = vmatprep.subr.mxu0 0.0
    %141 = vmatpush1.msra.mxu0 0.0
    %142 = vmatprep.mubr.f32.mxu0 0.0
    %143 = vmatmul.mubr.f32.gmra.mrb[0].mxu0 %v60
    %v144 = vpop.f32.mrb[0].mxu0
    %v145 = vadd.f32 0.0, %v144
    %v146 = vpop.f32.mrb[0].mxu0
    %147 = vmatprep.mubr.f32.mxu0 0.0
    %148 = vmatmul.mubr.f32.gmra.mrb[0].mxu0 %v61
    %v149 = vpop.f32.mrb[0].mxu0
    %v150 = vadd.f32 0.0, %v149
    %v151 = vpop.f32.mrb[0].mxu0
    %152 = vdwg.mxu0
    %v153 = vmax.f32 %v56, 0.0
    %v154 = vmax.f32 %v57, 0.0
    %v155 = vand.u32 2147483647, %v56
    %v156 = vand.u32 2147483647, %v57
    %v157 = vsub.f32 0.0, %v155
    %v158 = vsub.f32 0.0, %v156
    %v159 = vmul.f32 %v157, 1.442695
    %v160 = vpow.pop %v159
    %v161 = vmul.f32 %v158, 1.442695
    %v162 = vpow.pop %v161
    %v163 = vadd.f32 %v160, 1.0
    %v164 = vlog2.pop %v163
    %v165 = vmul.f32 %v164, 0.6931472
    %v166 = vmul.f32 -0.5, %v160
    %v167 = vadd.f32 %v166, 1.0
    %v168 = vmul.f32 %v167, %v160
    %v169 = vand.u32 2147483647, %v160
    %vm170 = vcmp.lt.f32.partialorder %v169, 0.0004427343
    %v171 = vsel %vm170, %v168, %v165
    %v172 = vadd.f32 %v162, 1.0
    %v173 = vlog2.pop %v172
    %v174 = vmul.f32 %v173, 0.6931472
    %v175 = vmul.f32 -0.5, %v162
    %v176 = vadd.f32 %v175, 1.0
    %v177 = vmul.f32 %v176, %v162
    %v178 = vand.u32 2147483647, %v162
    %vm179 = vcmp.lt.f32.partialorder %v178, 0.0004427343
    %v180 = vsel %vm179, %v177, %v174
    %v181 = vadd.f32 %v153, %v171
    %v182 = vadd.f32 %v154, %v180
    %v183 = vsub.f32 %v181, %v56
    %v184 = vsub.f32 %v182, %v57
    %v185 = vmul.f32 %v145, %v183
    %v186 = vmul.f32 %v150, %v184
    %v187 = vsub.f32 %v185, %v56
    %v188 = vsub.f32 %v186, %v57
    %v189 = vmul.f32 %v60, %v187
    %v190 = vmul.f32 %v61, %v188
    %v191 = vadd.f32 %v181, %v189
    %v192 = vadd.f32 %v182, %v190
    %193 = vst [vmem:[#allocation8] sm:$0xff] %v191
    %194 = vst [vmem:[#allocation8 + $0x8] sm:$0xff] %v192
    // Predicated region
    $region26: #{tpu_custom_call.1} parent=1 // pred_check
      _
    $region27: #{tpu_custom_call.1} parent=1 // pred_check_branch
      %196 = sbr.rel (0) target = $region29
    $region28: #{tpu_custom_call.1} parent=1 // pred_region
      %s198 = ssub.s32 256, 256
      %199 = vsyncadd [#allocation4], %s198
      %s200 = sshll.u32 [#allocation8], 4
      %s201 = int_to_ptr.vmem [resolvable:$true] %s200
      %206 = dma.vmem_to_hbm [thread:$0]  %s201, 256, %s3, [#allocation4], 128, 128, 8
    $region29: #{tpu_custom_call.1} parent=1 // pred_fallthru
      _
    // Predicated region
    $region30: #{tpu_custom_call.1} parent=1 // pred_check
      _
    $region31: #{tpu_custom_call.1} parent=1 // pred_check_branch
      %208 = sbr.rel (0) target = $region33
    $region32: #{tpu_custom_call.1} parent=1 // pred_region
      %209 = dma.done [#allocation4], 256
    $region33: #{tpu_custom_call.1} parent=1 // pred_fallthru
      _
    %210 = vsyncpa [#allocation3], 1
    %211 = vsyncpa [#allocation6], 1
    %212 = vsyncpa [#allocation4], 1

</llo_original>
